<compile_context>
chip_gen: v5e
topology: v5e:2x2
jax: 0.10.0
libtpu: 0.0.40
codegen_flags: <defaults>
</compile_context>

<pallas_src>
import jax
import jax.numpy as jnp
from jax.experimental import pallas as pl
from jax.experimental.pallas import tpu as pltpu  # noqa: F401  (TPU backend assumed)

# --- module hyper-parameters (small but consistent with the module asserts) --
D_MODEL = 32            # d_model
D_EMBED = 30            # d_embedding  (d_model - d_embedding == d_position)
D_POS = 2
NUM_LABELS = 3
NUM_HEADS = 4           # d_model % num_heads == 0
NUM_LAYERS = 4          # module builds num_heads layers and loops num_layers
D_FF = 4 * D_MODEL      # 128
EPS = 1e-5              # torch.nn.LayerNorm default eps

# --- packed vector-slab row layout (each row is D_FF = 128 lanes wide) -------
ROW_EMPTY = 0                               # empty-vector embedding (token 0)
ROW_NORM_G = 1                              # outer LN gamma
ROW_NORM_B = 2                              # outer LN beta
ROW_LN_G = 3                                # per-layer LN gamma  (NUM_LAYERS rows)
ROW_LN_B = ROW_LN_G + NUM_LAYERS            # per-layer LN beta   (NUM_LAYERS rows)
ROW_B1 = ROW_LN_B + NUM_LAYERS              # FFN bias1, full 128 (NUM_LAYERS rows)
ROW_B2 = ROW_B1 + NUM_LAYERS                # FFN bias2           (NUM_LAYERS rows)
N_VEC_ROWS = ROW_B2 + NUM_LAYERS            # 19
N_VEC_ROWS_PAD = ((N_VEC_ROWS + 7) // 8) * 8  # 24, sublane-aligned


def _layer_norm(x, g, b):
    # torch-style two-pass LN (numerically stable; the extra reduction is an
    # XLU op that is free at this size — kept per the correctness review).
    mu = jnp.mean(x, axis=-1, keepdims=True)
    var = jnp.mean(jnp.square(x - mu), axis=-1, keepdims=True)
    return (x - mu) * jax.lax.rsqrt(var + EPS) * g + b


# --- Pallas kernel: token-0 row through outer LN + NUM_LAYERS x (x+LN(x); FFN)
def _prompt_token0_kernel(vec_ref, w1_ref, w2_ref, out_ref):
    # vec_ref: (24, 128) packed slab, w1_ref: (L, 32, 128), w2_ref: (L, 128, 32)
    x = vec_ref[ROW_EMPTY:ROW_EMPTY + 1, 0:D_MODEL]          # (1, D_MODEL)

    # outer self.norm
    x = _layer_norm(x,
                    vec_ref[ROW_NORM_G:ROW_NORM_G + 1, 0:D_MODEL],
                    vec_ref[ROW_NORM_B:ROW_NORM_B + 1, 0:D_MODEL])

    for i in range(NUM_LAYERS):                              # static unroll
        g = vec_ref[ROW_LN_G + i:ROW_LN_G + i + 1, 0:D_MODEL]
        b = vec_ref[ROW_LN_B + i:ROW_LN_B + i + 1, 0:D_MODEL]
        # ResidualConnection: x + LN(x); the attention sublayer is discarded.
        y = x + _layer_norm(x, g, b)
        b1 = vec_ref[ROW_B1 + i:ROW_B1 + i + 1, :]           # (1, D_FF)
        b2 = vec_ref[ROW_B2 + i:ROW_B2 + i + 1, 0:D_MODEL]   # (1, D_MODEL)
        # FFN: linear_2(relu(linear_1(y))), dropout = identity (eval)
        h = jnp.dot(y, w1_ref[i], preferred_element_type=jnp.float32) + b1
        h = jnp.maximum(h, 0.0)
        x = jnp.dot(h, w2_ref[i], preferred_element_type=jnp.float32) + b2

    # single (1, 32) store; batch broadcast happens in the wrapper
    out_ref[...] = x.astype(out_ref.dtype)


def _pack_vec_slab(params):
    """Coalesce all small parameter vectors into one (24, 128) f32 slab."""
    def pad_to_ff(v):
        return jnp.pad(v, ((0, 0), (0, D_FF - v.shape[-1])))
    slab = jnp.concatenate([
        pad_to_ff(params["empty_emb"]),     # 1 row
        pad_to_ff(params["norm_g"]),        # 1 row
        pad_to_ff(params["norm_b"]),        # 1 row
        pad_to_ff(params["ln_g"]),          # NUM_LAYERS rows
        pad_to_ff(params["ln_b"]),          # NUM_LAYERS rows
        params["b1"],                       # NUM_LAYERS rows (already 128 wide)
        pad_to_ff(params["b2"]),            # NUM_LAYERS rows
    ], axis=0).astype(jnp.float32)
    return jnp.pad(slab, ((0, N_VEC_ROWS_PAD - N_VEC_ROWS), (0, 0)))


def prompt_self_attention(prompts, params):
    """Matches PromptSelfAttention.forward(prompts) -> (B, d_model)."""
    B = prompts.shape[0]
    # The returned slice input[:, 0, :] of the reference module does not depend
    # on the prompt tokens (attention output is discarded, LN/FFN per-token);
    # prompts only supply B here.  Full path verified by the pure-JAX reference.
    vec_slab = _pack_vec_slab(params)
    w1, w2 = params["w1"], params["w2"]

    flops = 2 * 2 * D_MODEL * D_FF * NUM_LAYERS                   # 8 tiny matmuls
    bytes_accessed = 4 * (vec_slab.size + w1.size + w2.size + D_MODEL)

    row = pl.pallas_call(
        _prompt_token0_kernel,
        # No grid / no BlockSpec tiling: single step, whole (tiny) arrays in VMEM,
        # 3 input DMAs total, no double-buffering of a degenerate pipeline.
        out_shape=jax.ShapeDtypeStruct((1, D_MODEL), jnp.float32),
        cost_estimate=pl.CostEstimate(flops=flops, transcendentals=0,
                                      bytes_accessed=bytes_accessed),
    )(vec_slab, w1, w2)

    # batch-invariant result: broadcast in the wrapper (pure layout plumbing)
    return jnp.broadcast_to(row, (B, D_MODEL))


# --- pure-JAX reference: FULL computation over all tokens (verification) -----
def _build_sequence(prompts, params):
    B, C, L = prompts.shape
    flat = prompts.reshape(B * L, C)                       # same row-major reshape as torch
    x_pos = flat[:, 0:1]
    y_pos = flat[:, 1:2]
    labels = flat[:, 2].astype(jnp.int32)                  # .to(torch.int) truncation
    lab_emb = jnp.take(params["label_emb"], labels, axis=0)          # (B*L, D_EMBED)
    emb_pos = jnp.concatenate([lab_emb, x_pos, y_pos], axis=1)       # (B*L, D_MODEL)
    seq = emb_pos.reshape(B, L, D_MODEL)
    empty = jnp.broadcast_to(params["empty_emb"][0][None, None, :], (B, 1, D_MODEL))
    return jnp.concatenate([empty, seq], axis=1)           # (B, L+1, D_MODEL)


def prompt_self_attention_ref(prompts, params):
    def ln(x, g, b):                                        # two-pass torch-style LN
        mu = jnp.mean(x, axis=-1, keepdims=True)
        var = jnp.mean(jnp.square(x - mu), axis=-1, keepdims=True)
        return (x - mu) * jax.lax.rsqrt(var + EPS) * g + b

    x = _build_sequence(prompts, params).astype(jnp.float32)
    x = ln(x, params["norm_g"], params["norm_b"])
    for i in range(NUM_LAYERS):
        y = x + ln(x, params["ln_g"][i], params["ln_b"][i])
        h = jnp.maximum(jnp.einsum("bsd,df->bsf", y, params["w1"][i]) + params["b1"][i], 0.0)
        x = jnp.einsum("bsf,fd->bsd", h, params["w2"][i]) + params["b2"][i]
    return x[:, 0, :]


def make_params(key):
    ks = jax.random.split(key, 10)
    return {
        "label_emb": jax.random.normal(ks[0], (NUM_LABELS, D_EMBED), jnp.float32),
        "empty_emb": jax.random.normal(ks[1], (1, D_MODEL), jnp.float32),
        "norm_g": 1.0 + 0.1 * jax.random.normal(ks[2], (1, D_MODEL), jnp.float32),
        "norm_b": 0.1 * jax.random.normal(ks[3], (1, D_MODEL), jnp.float32),
        "ln_g": 1.0 + 0.1 * jax.random.normal(ks[4], (NUM_LAYERS, D_MODEL), jnp.float32),
        "ln_b": 0.1 * jax.random.normal(ks[5], (NUM_LAYERS, D_MODEL), jnp.float32),
        "w1": 0.1 * jax.random.normal(ks[6], (NUM_LAYERS, D_MODEL, D_FF), jnp.float32),
        "b1": 0.01 * jax.random.normal(ks[7], (NUM_LAYERS, D_FF), jnp.float32),
        "w2": 0.1 * jax.random.normal(ks[8], (NUM_LAYERS, D_FF, D_MODEL), jnp.float32),
        "b2": 0.01 * jax.random.normal(ks[9], (NUM_LAYERS, D_MODEL), jnp.float32),
    }


if __name__ == "__main__":
    B, L = 2, 8
    params = make_params(jax.random.PRNGKey(0))

    # Build prompts so that prompts.reshape(B*L, 3) (the exact op the module
    # does) yields [x_pos, y_pos, label] columns with valid integer labels.
    kx, ky, kl = jax.random.split(jax.random.PRNGKey(1), 3)
    xp = jax.random.uniform(kx, (B * L, 1), jnp.float32)
    yp = jax.random.uniform(ky, (B * L, 1), jnp.float32)
    lab = jax.random.randint(kl, (B * L, 1), 0, NUM_LABELS).astype(jnp.float32)
    flat = jnp.concatenate([xp, yp, lab], axis=1)          # (B*L, 3)
    prompts = flat.reshape(B, 3, L)                        # (B, C, L) module input

    out = prompt_self_attention(prompts, params)
    jax.block_until_ready(out)

    ref = prompt_self_attention_ref(prompts, params)       # full-path reference
    assert out.shape == (B, D_MODEL)
    assert jnp.allclose(out, ref, atol=1e-4, rtol=1e-4), "kernel != reference"

    print("KERNEL_OK")
</pallas_src>

<mosaic_0001>
module attributes {stable_mosaic.version = 11 : i64} {
  func.func @_prompt_token0_kernel(%arg0: memref<24x128xf32, #tpu.memory_space<vmem>>, %arg1: memref<4x32x128xf32, #tpu.memory_space<vmem>>, %arg2: memref<4x128x32xf32, #tpu.memory_space<vmem>>, %arg3: memref<1x32xf32, #tpu.memory_space<vmem>>) attributes {dimension_semantics = [], scalar_prefetch = 0 : i64, scratch_operands = 0 : i64, tpu.core_type = #tpu.core_type<tc>} {
    %c0 = arith.constant 0 : index
    %c0_0 = arith.constant 0 : index
    %0 = vector.load %arg0[%c0, %c0_0] : memref<24x128xf32, #tpu.memory_space<vmem>>, vector<1x32xf32>
    %c1 = arith.constant 1 : index
    %c0_1 = arith.constant 0 : index
    %1 = vector.load %arg0[%c1, %c0_1] : memref<24x128xf32, #tpu.memory_space<vmem>>, vector<1x32xf32>
    %c2 = arith.constant 2 : index
    %c0_2 = arith.constant 0 : index
    %2 = vector.load %arg0[%c2, %c0_2] : memref<24x128xf32, #tpu.memory_space<vmem>>, vector<1x32xf32>
    %cst = arith.constant dense<0.000000e+00> : vector<1xf32>
    %3 = vector.multi_reduction <add>, %0, %cst [1] : vector<1x32xf32> to vector<1xf32>
    %4 = vector.shape_cast %3 : vector<1xf32> to vector<1x1xf32>
    %cst_3 = arith.constant 3.200000e+01 : f32
    %5 = vector.broadcast %cst_3 : f32 to vector<1x1xf32>
    %6 = arith.divf %4, %5 : vector<1x1xf32>
    %7 = vector.broadcast %6 : vector<1x1xf32> to vector<1x32xf32>
    %8 = arith.subf %0, %7 : vector<1x32xf32>
    %9 = arith.mulf %8, %8 : vector<1x32xf32>
    %cst_4 = arith.constant dense<0.000000e+00> : vector<1xf32>
    %10 = vector.multi_reduction <add>, %9, %cst_4 [1] : vector<1x32xf32> to vector<1xf32>
    %11 = vector.shape_cast %10 : vector<1xf32> to vector<1x1xf32>
    %cst_5 = arith.constant 3.200000e+01 : f32
    %12 = vector.broadcast %cst_5 : f32 to vector<1x1xf32>
    %13 = arith.divf %11, %12 : vector<1x1xf32>
    %14 = vector.broadcast %6 : vector<1x1xf32> to vector<1x32xf32>
    %15 = arith.subf %0, %14 : vector<1x32xf32>
    %cst_6 = arith.constant 9.99999974E-6 : f32
    %16 = vector.broadcast %cst_6 : f32 to vector<1x1xf32>
    %17 = arith.addf %13, %16 : vector<1x1xf32>
    %18 = math.rsqrt %17 : vector<1x1xf32>
    %19 = vector.broadcast %18 : vector<1x1xf32> to vector<1x32xf32>
    %20 = arith.mulf %15, %19 : vector<1x32xf32>
    %21 = arith.mulf %20, %1 : vector<1x32xf32>
    %22 = arith.addf %21, %2 : vector<1x32xf32>
    %c3 = arith.constant 3 : index
    %c0_7 = arith.constant 0 : index
    %23 = vector.load %arg0[%c3, %c0_7] : memref<24x128xf32, #tpu.memory_space<vmem>>, vector<1x32xf32>
    %c7 = arith.constant 7 : index
    %c0_8 = arith.constant 0 : index
    %24 = vector.load %arg0[%c7, %c0_8] : memref<24x128xf32, #tpu.memory_space<vmem>>, vector<1x32xf32>
    %cst_9 = arith.constant dense<0.000000e+00> : vector<1xf32>
    %25 = vector.multi_reduction <add>, %22, %cst_9 [1] : vector<1x32xf32> to vector<1xf32>
    %26 = vector.shape_cast %25 : vector<1xf32> to vector<1x1xf32>
    %cst_10 = arith.constant 3.200000e+01 : f32
    %27 = vector.broadcast %cst_10 : f32 to vector<1x1xf32>
    %28 = arith.divf %26, %27 : vector<1x1xf32>
    %29 = vector.broadcast %28 : vector<1x1xf32> to vector<1x32xf32>
    %30 = arith.subf %22, %29 : vector<1x32xf32>
    %31 = arith.mulf %30, %30 : vector<1x32xf32>
    %cst_11 = arith.constant dense<0.000000e+00> : vector<1xf32>
    %32 = vector.multi_reduction <add>, %31, %cst_11 [1] : vector<1x32xf32> to vector<1xf32>
    %33 = vector.shape_cast %32 : vector<1xf32> to vector<1x1xf32>
    %cst_12 = arith.constant 3.200000e+01 : f32
    %34 = vector.broadcast %cst_12 : f32 to vector<1x1xf32>
    %35 = arith.divf %33, %34 : vector<1x1xf32>
    %36 = vector.broadcast %28 : vector<1x1xf32> to vector<1x32xf32>
    %37 = arith.subf %22, %36 : vector<1x32xf32>
    %cst_13 = arith.constant 9.99999974E-6 : f32
    %38 = vector.broadcast %cst_13 : f32 to vector<1x1xf32>
    %39 = arith.addf %35, %38 : vector<1x1xf32>
    %40 = math.rsqrt %39 : vector<1x1xf32>
    %41 = vector.broadcast %40 : vector<1x1xf32> to vector<1x32xf32>
    %42 = arith.mulf %37, %41 : vector<1x32xf32>
    %43 = arith.mulf %42, %23 : vector<1x32xf32>
    %44 = arith.addf %43, %24 : vector<1x32xf32>
    %45 = arith.addf %22, %44 : vector<1x32xf32>
    %c11 = arith.constant 11 : index
    %c0_14 = arith.constant 0 : index
    %46 = vector.load %arg0[%c11, %c0_14] : memref<24x128xf32, #tpu.memory_space<vmem>>, vector<1x128xf32>
    %c15 = arith.constant 15 : index
    %c0_15 = arith.constant 0 : index
    %47 = vector.load %arg0[%c15, %c0_15] : memref<24x128xf32, #tpu.memory_space<vmem>>, vector<1x32xf32>
    %c0_16 = arith.constant 0 : index
    %c0_17 = arith.constant 0 : index
    %c0_18 = arith.constant 0 : index
    %48 = vector.load %arg1[%c0_16, %c0_17, %c0_18] : memref<4x32x128xf32, #tpu.memory_space<vmem>>, vector<1x32x128xf32>
    %49 = vector.shape_cast %48 : vector<1x32x128xf32> to vector<32x128xf32>
    %cst_19 = arith.constant dense<0.000000e+00> : vector<1x128xf32>
    %50 = tpu.matmul %45, %49, %cst_19 {dimension_numbers = #tpu.dot_dimension_numbers<[1], [0], [0], [1], [0, 0, 1, 1], [], []>} : vector<1x32xf32>, vector<32x128xf32>, vector<1x128xf32> -> vector<1x128xf32>
    %51 = arith.addf %50, %46 : vector<1x128xf32>
    %cst_20 = arith.constant 0.000000e+00 : f32
    %52 = vector.broadcast %cst_20 : f32 to vector<1x128xf32>
    %53 = arith.maximumf %51, %52 : vector<1x128xf32>
    %c0_21 = arith.constant 0 : index
    %c0_22 = arith.constant 0 : index
    %c0_23 = arith.constant 0 : index
    %54 = vector.load %arg2[%c0_21, %c0_22, %c0_23] : memref<4x128x32xf32, #tpu.memory_space<vmem>>, vector<1x128x32xf32>
    %55 = vector.shape_cast %54 : vector<1x128x32xf32> to vector<128x32xf32>
    %cst_24 = arith.constant dense<0.000000e+00> : vector<1x32xf32>
    %56 = tpu.matmul %53, %55, %cst_24 {dimension_numbers = #tpu.dot_dimension_numbers<[1], [0], [0], [1], [0, 0, 1, 1], [], []>} : vector<1x128xf32>, vector<128x32xf32>, vector<1x32xf32> -> vector<1x32xf32>
    %57 = arith.addf %56, %47 : vector<1x32xf32>
    %c4 = arith.constant 4 : index
    %c0_25 = arith.constant 0 : index
    %58 = vector.load %arg0[%c4, %c0_25] : memref<24x128xf32, #tpu.memory_space<vmem>>, vector<1x32xf32>
    %c8 = arith.constant 8 : index
    %c0_26 = arith.constant 0 : index
    %59 = vector.load %arg0[%c8, %c0_26] : memref<24x128xf32, #tpu.memory_space<vmem>>, vector<1x32xf32>
    %cst_27 = arith.constant dense<0.000000e+00> : vector<1xf32>
    %60 = vector.multi_reduction <add>, %57, %cst_27 [1] : vector<1x32xf32> to vector<1xf32>
    %61 = vector.shape_cast %60 : vector<1xf32> to vector<1x1xf32>
    %cst_28 = arith.constant 3.200000e+01 : f32
    %62 = vector.broadcast %cst_28 : f32 to vector<1x1xf32>
    %63 = arith.divf %61, %62 : vector<1x1xf32>
    %64 = vector.broadcast %63 : vector<1x1xf32> to vector<1x32xf32>
    %65 = arith.subf %57, %64 : vector<1x32xf32>
    %66 = arith.mulf %65, %65 : vector<1x32xf32>
    %cst_29 = arith.constant dense<0.000000e+00> : vector<1xf32>
    %67 = vector.multi_reduction <add>, %66, %cst_29 [1] : vector<1x32xf32> to vector<1xf32>
    %68 = vector.shape_cast %67 : vector<1xf32> to vector<1x1xf32>
    %cst_30 = arith.constant 3.200000e+01 : f32
    %69 = vector.broadcast %cst_30 : f32 to vector<1x1xf32>
    %70 = arith.divf %68, %69 : vector<1x1xf32>
    %71 = vector.broadcast %63 : vector<1x1xf32> to vector<1x32xf32>
    %72 = arith.subf %57, %71 : vector<1x32xf32>
    %cst_31 = arith.constant 9.99999974E-6 : f32
    %73 = vector.broadcast %cst_31 : f32 to vector<1x1xf32>
    %74 = arith.addf %70, %73 : vector<1x1xf32>
    %75 = math.rsqrt %74 : vector<1x1xf32>
    %76 = vector.broadcast %75 : vector<1x1xf32> to vector<1x32xf32>
    %77 = arith.mulf %72, %76 : vector<1x32xf32>
    %78 = arith.mulf %77, %58 : vector<1x32xf32>
    %79 = arith.addf %78, %59 : vector<1x32xf32>
    %80 = arith.addf %57, %79 : vector<1x32xf32>
    %c12 = arith.constant 12 : index
    %c0_32 = arith.constant 0 : index
    %81 = vector.load %arg0[%c12, %c0_32] : memref<24x128xf32, #tpu.memory_space<vmem>>, vector<1x128xf32>
    %c16 = arith.constant 16 : index
    %c0_33 = arith.constant 0 : index
    %82 = vector.load %arg0[%c16, %c0_33] : memref<24x128xf32, #tpu.memory_space<vmem>>, vector<1x32xf32>
    %c1_34 = arith.constant 1 : index
    %c0_35 = arith.constant 0 : index
    %c0_36 = arith.constant 0 : index
    %83 = vector.load %arg1[%c1_34, %c0_35, %c0_36] : memref<4x32x128xf32, #tpu.memory_space<vmem>>, vector<1x32x128xf32>
    %84 = vector.shape_cast %83 : vector<1x32x128xf32> to vector<32x128xf32>
    %cst_37 = arith.constant dense<0.000000e+00> : vector<1x128xf32>
    %85 = tpu.matmul %80, %84, %cst_37 {dimension_numbers = #tpu.dot_dimension_numbers<[1], [0], [0], [1], [0, 0, 1, 1], [], []>} : vector<1x32xf32>, vector<32x128xf32>, vector<1x128xf32> -> vector<1x128xf32>
    %86 = arith.addf %85, %81 : vector<1x128xf32>
    %cst_38 = arith.constant 0.000000e+00 : f32
    %87 = vector.broadcast %cst_38 : f32 to vector<1x128xf32>
    %88 = arith.maximumf %86, %87 : vector<1x128xf32>
    %c1_39 = arith.constant 1 : index
    %c0_40 = arith.constant 0 : index
    %c0_41 = arith.constant 0 : index
    %89 = vector.load %arg2[%c1_39, %c0_40, %c0_41] : memref<4x128x32xf32, #tpu.memory_space<vmem>>, vector<1x128x32xf32>
    %90 = vector.shape_cast %89 : vector<1x128x32xf32> to vector<128x32xf32>
    %cst_42 = arith.constant dense<0.000000e+00> : vector<1x32xf32>
    %91 = tpu.matmul %88, %90, %cst_42 {dimension_numbers = #tpu.dot_dimension_numbers<[1], [0], [0], [1], [0, 0, 1, 1], [], []>} : vector<1x128xf32>, vector<128x32xf32>, vector<1x32xf32> -> vector<1x32xf32>
    %92 = arith.addf %91, %82 : vector<1x32xf32>
    %c5 = arith.constant 5 : index
    %c0_43 = arith.constant 0 : index
    %93 = vector.load %arg0[%c5, %c0_43] : memref<24x128xf32, #tpu.memory_space<vmem>>, vector<1x32xf32>
    %c9 = arith.constant 9 : index
    %c0_44 = arith.constant 0 : index
    %94 = vector.load %arg0[%c9, %c0_44] : memref<24x128xf32, #tpu.memory_space<vmem>>, vector<1x32xf32>
    %cst_45 = arith.constant dense<0.000000e+00> : vector<1xf32>
    %95 = vector.multi_reduction <add>, %92, %cst_45 [1] : vector<1x32xf32> to vector<1xf32>
    %96 = vector.shape_cast %95 : vector<1xf32> to vector<1x1xf32>
    %cst_46 = arith.constant 3.200000e+01 : f32
    %97 = vector.broadcast %cst_46 : f32 to vector<1x1xf32>
    %98 = arith.divf %96, %97 : vector<1x1xf32>
    %99 = vector.broadcast %98 : vector<1x1xf32> to vector<1x32xf32>
    %100 = arith.subf %92, %99 : vector<1x32xf32>
    %101 = arith.mulf %100, %100 : vector<1x32xf32>
    %cst_47 = arith.constant dense<0.000000e+00> : vector<1xf32>
    %102 = vector.multi_reduction <add>, %101, %cst_47 [1] : vector<1x32xf32> to vector<1xf32>
    %103 = vector.shape_cast %102 : vector<1xf32> to vector<1x1xf32>
    %cst_48 = arith.constant 3.200000e+01 : f32
    %104 = vector.broadcast %cst_48 : f32 to vector<1x1xf32>
    %105 = arith.divf %103, %104 : vector<1x1xf32>
    %106 = vector.broadcast %98 : vector<1x1xf32> to vector<1x32xf32>
    %107 = arith.subf %92, %106 : vector<1x32xf32>
    %cst_49 = arith.constant 9.99999974E-6 : f32
    %108 = vector.broadcast %cst_49 : f32 to vector<1x1xf32>
    %109 = arith.addf %105, %108 : vector<1x1xf32>
    %110 = math.rsqrt %109 : vector<1x1xf32>
    %111 = vector.broadcast %110 : vector<1x1xf32> to vector<1x32xf32>
    %112 = arith.mulf %107, %111 : vector<1x32xf32>
    %113 = arith.mulf %112, %93 : vector<1x32xf32>
    %114 = arith.addf %113, %94 : vector<1x32xf32>
    %115 = arith.addf %92, %114 : vector<1x32xf32>
    %c13 = arith.constant 13 : index
    %c0_50 = arith.constant 0 : index
    %116 = vector.load %arg0[%c13, %c0_50] : memref<24x128xf32, #tpu.memory_space<vmem>>, vector<1x128xf32>
    %c17 = arith.constant 17 : index
    %c0_51 = arith.constant 0 : index
    %117 = vector.load %arg0[%c17, %c0_51] : memref<24x128xf32, #tpu.memory_space<vmem>>, vector<1x32xf32>
    %c2_52 = arith.constant 2 : index
    %c0_53 = arith.constant 0 : index
    %c0_54 = arith.constant 0 : index
    %118 = vector.load %arg1[%c2_52, %c0_53, %c0_54] : memref<4x32x128xf32, #tpu.memory_space<vmem>>, vector<1x32x128xf32>
    %119 = vector.shape_cast %118 : vector<1x32x128xf32> to vector<32x128xf32>
    %cst_55 = arith.constant dense<0.000000e+00> : vector<1x128xf32>
    %120 = tpu.matmul %115, %119, %cst_55 {dimension_numbers = #tpu.dot_dimension_numbers<[1], [0], [0], [1], [0, 0, 1, 1], [], []>} : vector<1x32xf32>, vector<32x128xf32>, vector<1x128xf32> -> vector<1x128xf32>
    %121 = arith.addf %120, %116 : vector<1x128xf32>
    %cst_56 = arith.constant 0.000000e+00 : f32
    %122 = vector.broadcast %cst_56 : f32 to vector<1x128xf32>
    %123 = arith.maximumf %121, %122 : vector<1x128xf32>
    %c2_57 = arith.constant 2 : index
    %c0_58 = arith.constant 0 : index
    %c0_59 = arith.constant 0 : index
    %124 = vector.load %arg2[%c2_57, %c0_58, %c0_59] : memref<4x128x32xf32, #tpu.memory_space<vmem>>, vector<1x128x32xf32>
    %125 = vector.shape_cast %124 : vector<1x128x32xf32> to vector<128x32xf32>
    %cst_60 = arith.constant dense<0.000000e+00> : vector<1x32xf32>
    %126 = tpu.matmul %123, %125, %cst_60 {dimension_numbers = #tpu.dot_dimension_numbers<[1], [0], [0], [1], [0, 0, 1, 1], [], []>} : vector<1x128xf32>, vector<128x32xf32>, vector<1x32xf32> -> vector<1x32xf32>
    %127 = arith.addf %126, %117 : vector<1x32xf32>
    %c6 = arith.constant 6 : index
    %c0_61 = arith.constant 0 : index
    %128 = vector.load %arg0[%c6, %c0_61] : memref<24x128xf32, #tpu.memory_space<vmem>>, vector<1x32xf32>
    %c10 = arith.constant 10 : index
    %c0_62 = arith.constant 0 : index
    %129 = vector.load %arg0[%c10, %c0_62] : memref<24x128xf32, #tpu.memory_space<vmem>>, vector<1x32xf32>
    %cst_63 = arith.constant dense<0.000000e+00> : vector<1xf32>
    %130 = vector.multi_reduction <add>, %127, %cst_63 [1] : vector<1x32xf32> to vector<1xf32>
    %131 = vector.shape_cast %130 : vector<1xf32> to vector<1x1xf32>
    %cst_64 = arith.constant 3.200000e+01 : f32
    %132 = vector.broadcast %cst_64 : f32 to vector<1x1xf32>
    %133 = arith.divf %131, %132 : vector<1x1xf32>
    %134 = vector.broadcast %133 : vector<1x1xf32> to vector<1x32xf32>
    %135 = arith.subf %127, %134 : vector<1x32xf32>
    %136 = arith.mulf %135, %135 : vector<1x32xf32>
    %cst_65 = arith.constant dense<0.000000e+00> : vector<1xf32>
    %137 = vector.multi_reduction <add>, %136, %cst_65 [1] : vector<1x32xf32> to vector<1xf32>
    %138 = vector.shape_cast %137 : vector<1xf32> to vector<1x1xf32>
    %cst_66 = arith.constant 3.200000e+01 : f32
    %139 = vector.broadcast %cst_66 : f32 to vector<1x1xf32>
    %140 = arith.divf %138, %139 : vector<1x1xf32>
    %141 = vector.broadcast %133 : vector<1x1xf32> to vector<1x32xf32>
    %142 = arith.subf %127, %141 : vector<1x32xf32>
    %cst_67 = arith.constant 9.99999974E-6 : f32
    %143 = vector.broadcast %cst_67 : f32 to vector<1x1xf32>
    %144 = arith.addf %140, %143 : vector<1x1xf32>
    %145 = math.rsqrt %144 : vector<1x1xf32>
    %146 = vector.broadcast %145 : vector<1x1xf32> to vector<1x32xf32>
    %147 = arith.mulf %142, %146 : vector<1x32xf32>
    %148 = arith.mulf %147, %128 : vector<1x32xf32>
    %149 = arith.addf %148, %129 : vector<1x32xf32>
    %150 = arith.addf %127, %149 : vector<1x32xf32>
    %c14 = arith.constant 14 : index
    %c0_68 = arith.constant 0 : index
    %151 = vector.load %arg0[%c14, %c0_68] : memref<24x128xf32, #tpu.memory_space<vmem>>, vector<1x128xf32>
    %c18 = arith.constant 18 : index
    %c0_69 = arith.constant 0 : index
    %152 = vector.load %arg0[%c18, %c0_69] : memref<24x128xf32, #tpu.memory_space<vmem>>, vector<1x32xf32>
    %c3_70 = arith.constant 3 : index
    %c0_71 = arith.constant 0 : index
    %c0_72 = arith.constant 0 : index
    %153 = vector.load %arg1[%c3_70, %c0_71, %c0_72] : memref<4x32x128xf32, #tpu.memory_space<vmem>>, vector<1x32x128xf32>
    %154 = vector.shape_cast %153 : vector<1x32x128xf32> to vector<32x128xf32>
    %cst_73 = arith.constant dense<0.000000e+00> : vector<1x128xf32>
    %155 = tpu.matmul %150, %154, %cst_73 {dimension_numbers = #tpu.dot_dimension_numbers<[1], [0], [0], [1], [0, 0, 1, 1], [], []>} : vector<1x32xf32>, vector<32x128xf32>, vector<1x128xf32> -> vector<1x128xf32>
    %156 = arith.addf %155, %151 : vector<1x128xf32>
    %cst_74 = arith.constant 0.000000e+00 : f32
    %157 = vector.broadcast %cst_74 : f32 to vector<1x128xf32>
    %158 = arith.maximumf %156, %157 : vector<1x128xf32>
    %c3_75 = arith.constant 3 : index
    %c0_76 = arith.constant 0 : index
    %c0_77 = arith.constant 0 : index
    %159 = vector.load %arg2[%c3_75, %c0_76, %c0_77] : memref<4x128x32xf32, #tpu.memory_space<vmem>>, vector<1x128x32xf32>
    %160 = vector.shape_cast %159 : vector<1x128x32xf32> to vector<128x32xf32>
    %cst_78 = arith.constant dense<0.000000e+00> : vector<1x32xf32>
    %161 = tpu.matmul %158, %160, %cst_78 {dimension_numbers = #tpu.dot_dimension_numbers<[1], [0], [0], [1], [0, 0, 1, 1], [], []>} : vector<1x128xf32>, vector<128x32xf32>, vector<1x32xf32> -> vector<1x32xf32>
    %162 = arith.addf %161, %152 : vector<1x32xf32>
    %c0_79 = arith.constant 0 : index
    %c0_80 = arith.constant 0 : index
    %163 = vector.load %arg3[%c0_79, %c0_80] : memref<1x32xf32, #tpu.memory_space<vmem>>, vector<1x32xf32>
    tpu.vector_store %arg3[%c0_79, %c0_80], %162 {strides = array<i32>} : memref<1x32xf32, #tpu.memory_space<vmem>>, vector<1x32xf32>,
    return
  }
}

</mosaic_0001>

<llo_original>
// kernel: tpu_custom_call.1
$region0: #{tpu_custom_call.1}
  #allocation0 [shape = 'u32[]', space=smem, size = 0x4, offset = 0x4, fixed_abs, tag = 'smem constant byte address 0x4 - core index']
  #allocation1 [shape = 'u32[72,128]{1,0:T(1,128)}', space=vmem, size = 0x9000, scoped, tag = 'internal scratch']
  %s0 = inlined_call_operand.vmem [shape: f32[24,128], index: 0, kind: input, shape index: {}]
  %s1 = inlined_call_operand.vmem [shape: f32[4,32,128], index: 1, kind: input, shape index: {}]
  %s2 = inlined_call_operand.vmem [shape: f32[4,128,32], index: 2, kind: input, shape index: {}]
  %s3 = inlined_call_operand.hbm [shape: f32[1,32], index: 3, kind: output, shape index: {}]
  %s4 = sld [smem:[#allocation0]]
  $region22: #{tpu_custom_call.1} parent=0
    _
  %s6 = ssub.s32 1, %s4
  %s7 = scalar_select 0, %s6, %s4
  $region1: #{tpu_custom_call.1} parent=0
    #allocation2 [shape = 'u8[512]{0}', space=vmem, size = 0x400, scoped, tag = 'output window, operand 0, single buffered']
    #allocation3 [shape = 's32[1]{0}', space=sflag, size = 0x4, scoped, tag = 'scoped memory for tpu_custom_call.1']
    %8 = vsyncpa [#allocation3], 0
    // Predicated region
    $region2: #{tpu_custom_call.1} parent=1 // pred_check
      _
    $region3: #{tpu_custom_call.1} parent=1 // pred_check_branch
      %10 = sbr.rel (0) target = $region5
    $region4: #{tpu_custom_call.1} parent=1 // pred_region
      _
    $region5: #{tpu_custom_call.1} parent=1 // pred_fallthru
      _
    // Predicated region
    $region6: #{tpu_custom_call.1} parent=1 // pred_check
      _
    $region7: #{tpu_custom_call.1} parent=1 // pred_check_branch
      %12 = sbr.rel (0) target = $region9
    $region8: #{tpu_custom_call.1} parent=1 // pred_region
      _
    $region9: #{tpu_custom_call.1} parent=1 // pred_fallthru
      _
    // Predicated region
    $region10: #{tpu_custom_call.1} parent=1 // pred_check
      _
    $region11: #{tpu_custom_call.1} parent=1 // pred_check_branch
      %14 = sbr.rel (0) target = $region13
    $region12: #{tpu_custom_call.1} parent=1 // pred_region
      _
    $region13: #{tpu_custom_call.1} parent=1 // pred_fallthru
      _
    %v15 = vld [vmem:[%s0] sm:$0x1]
    %v16 = vld [vmem:[%s0 + $0x1] sm:$0x1]
    %v17 = vld [vmem:[%s0 + $0x2] sm:$0x1]
    %vm18 = vcmask 253952
    %v19 = vsel %vm18, %v15, 0.0
    %20 = vadd.xlane.f32.xlu0 %v19
    %v21 = vpop.xlane.xlu0 %20
    %v22 = vrcp.pop 32.0
    %v23 = vmul.f32 32.0, %v22
    %v24 = vsub.f32 1.0, %v23
    %v25 = vmul.f32 %v22, %v24
    %v26 = vadd.f32 %v22, %v25
    %vm27 = vweird.f32 %v22
    %v28 = vsel %vm27, %v22, %v26
    %v29 = vmul.f32 %v21, %v28
    %v30 = vsub.f32 %v15, %v29
    %v31 = vmul.f32 %v30, %v30
    %v32 = vsel %vm18, %v31, 0.0
    %33 = vadd.xlane.f32.xlu0 %v32
    %v34 = vpop.xlane.xlu0 %33
    %v35 = vmul.f32 %v34, %v28
    %v36 = vadd.f32 %v35, 1e-05
    %v37 = vrsqrt.pop %v36
    %v38 = vmul.f32 %v37, %v36
    %v39 = vmul.f32 %v38, %v37
    %v40 = vmul.f32 0.5, %v39
    %v41 = vsub.f32 1.5, %v40
    %v42 = vmul.f32 %v37, %v41
    %vm43 = vweird.f32 %v36
    %vm44 = vweird.f32 %v37
    %vm45 = vmor %vm43, %vm44
    %v46 = vsel %vm45, %v37, %v42
    %v47 = vmul.f32 %v30, %v46
    %v48 = vmul.f32 %v47, %v16
    %v49 = vadd.f32 %v48, %v17
    %v50 = vld [vmem:[%s0 + $0x3] sm:$0x1]
    %v51 = vld [vmem:[%s0 + $0x7] sm:$0x1]
    %v52 = vsel %vm18, %v49, 0.0
    %53 = vadd.xlane.f32.xlu0 %v52
    %v54 = vpop.xlane.xlu0 %53
    %v55 = vmul.f32 %v54, %v28
    %v56 = vsub.f32 %v49, %v55
    %v57 = vmul.f32 %v56, %v56
    %v58 = vsel %vm18, %v57, 0.0
    %59 = vadd.xlane.f32.xlu0 %v58
    %v60 = vpop.xlane.xlu0 %59
    %v61 = vmul.f32 %v60, %v28
    %v62 = vadd.f32 %v61, 1e-05
    %v63 = vrsqrt.pop %v62
    %v64 = vmul.f32 %v63, %v62
    %v65 = vmul.f32 %v64, %v63
    %v66 = vmul.f32 0.5, %v65
    %v67 = vsub.f32 1.5, %v66
    %v68 = vmul.f32 %v63, %v67
    %vm69 = vweird.f32 %v62
    %vm70 = vweird.f32 %v63
    %vm71 = vmor %vm69, %vm70
    %v72 = vsel %vm71, %v63, %v68
    %v73 = vmul.f32 %v56, %v72
    %v74 = vmul.f32 %v73, %v50
    %v75 = vadd.f32 %v74, %v51
    %v76 = vadd.f32 %v49, %v75
    %v77 = vld [vmem:[%s0 + $0xb] sm:$0x1]
    %v78 = vld [vmem:[%s0 + $0xf] sm:$0x1]
    %v79 = vld [vmem:[%s1] sm:$0xff]
    %v80 = vld [vmem:[%s1 + $0x8] sm:$0xff]
    %v81 = vld [vmem:[%s1 + $0x10] sm:$0xff]
    %v82 = vld [vmem:[%s1 + $0x18] sm:$0xff]
    %vm83 = vcmask 261120
    %v85 = vsel %vm83, %v76, 0
    %87 = vmatpush.msra.mxu0 0.0
    %88 = vmatpush.msra.mxu0 0.0
    %89 = vmatpush.msra.mxu0 0.0
    %90 = vmatpush.msra.mxu0 0.0
    %91 = vmatpush.msra.mxu0 0.0
    %92 = vmatpush.msra.mxu0 0.0
    %93 = vmatpush.msra.mxu0 0.0
    %94 = vmatpush.msra.mxu0 0.0
    %95 = vmatpush.msra.mxu0 0.0
    %96 = vmatpush.msra.mxu0 0.0
    %97 = vmatpush.msra.mxu0 0.0
    %98 = vmatpush.msra.mxu0 0.0
    %99 = vmatpush.msra.mxu0 %v82
    %100 = vmatpush.msra.mxu0 %v81
    %101 = vmatpush.msra.mxu0 %v80
    %102 = vmatpush.msra.mxu0 %v79
    %103 = vmatmul.f32.gmra.mxu0 %v85
    %v104 = vpop.f32.mrf.mxu0
    %v105 = vadd.f32 %v77, %v104
    %106 = vdwg.mxu0
    %v107 = vmax.f32 %v105, 0.0
    %v108 = vld [vmem:[%s2] sm:$0xff]
    %v109 = vld [vmem:[%s2 + $0x8] sm:$0xff]
    %v110 = vld [vmem:[%s2 + $0x10] sm:$0xff]
    %v111 = vld [vmem:[%s2 + $0x18] sm:$0xff]
    %v112 = vld [vmem:[%s2 + $0x20] sm:$0xff]
    %v113 = vld [vmem:[%s2 + $0x28] sm:$0xff]
    %v114 = vld [vmem:[%s2 + $0x30] sm:$0xff]
    %v115 = vld [vmem:[%s2 + $0x38] sm:$0xff]
    %v116 = vld [vmem:[%s2 + $0x40] sm:$0xff]
    %v117 = vld [vmem:[%s2 + $0x48] sm:$0xff]
    %v118 = vld [vmem:[%s2 + $0x50] sm:$0xff]
    %v119 = vld [vmem:[%s2 + $0x58] sm:$0xff]
    %v120 = vld [vmem:[%s2 + $0x60] sm:$0xff]
    %v121 = vld [vmem:[%s2 + $0x68] sm:$0xff]
    %v122 = vld [vmem:[%s2 + $0x70] sm:$0xff]
    %v123 = vld [vmem:[%s2 + $0x78] sm:$0xff]
    %124 = vmatpush.msra.mxu0 %v123
    %125 = vmatpush.msra.mxu0 %v122
    %126 = vmatpush.msra.mxu0 %v121
    %127 = vmatpush.msra.mxu0 %v120
    %128 = vmatpush.msra.mxu0 %v119
    %129 = vmatpush.msra.mxu0 %v118
    %130 = vmatpush.msra.mxu0 %v117
    %131 = vmatpush.msra.mxu0 %v116
    %132 = vmatpush.msra.mxu0 %v115
    %133 = vmatpush.msra.mxu0 %v114
    %134 = vmatpush.msra.mxu0 %v113
    %135 = vmatpush.msra.mxu0 %v112
    %136 = vmatpush.msra.mxu0 %v111
    %137 = vmatpush.msra.mxu0 %v110
    %138 = vmatpush.msra.mxu0 %v109
    %139 = vmatpush.msra.mxu0 %v108
    %140 = vmatmul.f32.gmra.mxu0 %v107
    %v141 = vpop.f32.mrf.mxu0
    %v142 = vadd.f32 %v78, %v141
    %143 = vdwg.mxu0
    %v144 = vld [vmem:[%s0 + $0x4] sm:$0x1]
    %v145 = vld [vmem:[%s0 + $0x8] sm:$0x1]
    %v146 = vsel %vm18, %v142, 0.0
    %147 = vadd.xlane.f32.xlu0 %v146
    %v148 = vpop.xlane.xlu0 %147
    %v149 = vmul.f32 %v148, %v28
    %v150 = vsub.f32 %v142, %v149
    %v151 = vmul.f32 %v150, %v150
    %v152 = vsel %vm18, %v151, 0.0
    %153 = vadd.xlane.f32.xlu0 %v152
    %v154 = vpop.xlane.xlu0 %153
    %v155 = vmul.f32 %v154, %v28
    %v156 = vadd.f32 %v155, 1e-05
    %v157 = vrsqrt.pop %v156
    %v158 = vmul.f32 %v157, %v156
    %v159 = vmul.f32 %v158, %v157
    %v160 = vmul.f32 0.5, %v159
    %v161 = vsub.f32 1.5, %v160
    %v162 = vmul.f32 %v157, %v161
    %vm163 = vweird.f32 %v156
    %vm164 = vweird.f32 %v157
    %vm165 = vmor %vm163, %vm164
    %v166 = vsel %vm165, %v157, %v162
    %v167 = vmul.f32 %v150, %v166
    %v168 = vmul.f32 %v167, %v144
    %v169 = vadd.f32 %v168, %v145
    %v170 = vadd.f32 %v142, %v169
    %v171 = vld [vmem:[%s0 + $0xc] sm:$0x1]
    %v172 = vld [vmem:[%s0 + $0x10] sm:$0x1]
    %s173 = scalar_lea.vmem %s1, 32
    %v174 = vld [vmem:[%s173] sm:$0xff]
    %v175 = vld [vmem:[%s173 + $0x8] sm:$0xff]
    %v176 = vld [vmem:[%s173 + $0x10] sm:$0xff]
    %v177 = vld [vmem:[%s173 + $0x18] sm:$0xff]
    %v179 = vsel %vm83, %v170, 0
    %181 = vmatpush.msra.mxu0 0.0
    %182 = vmatpush.msra.mxu0 0.0
    %183 = vmatpush.msra.mxu0 0.0
    %184 = vmatpush.msra.mxu0 0.0
    %185 = vmatpush.msra.mxu0 0.0
    %186 = vmatpush.msra.mxu0 0.0
    %187 = vmatpush.msra.mxu0 0.0
    %188 = vmatpush.msra.mxu0 0.0
    %189 = vmatpush.msra.mxu0 0.0
    %190 = vmatpush.msra.mxu0 0.0
    %191 = vmatpush.msra.mxu0 0.0
    %192 = vmatpush.msra.mxu0 0.0
    %193 = vmatpush.msra.mxu0 %v177
    %194 = vmatpush.msra.mxu0 %v176
    %195 = vmatpush.msra.mxu0 %v175
    %196 = vmatpush.msra.mxu0 %v174
    %197 = vmatmul.f32.gmra.mxu0 %v179
    %v198 = vpop.f32.mrf.mxu0
    %v199 = vadd.f32 %v171, %v198
    %200 = vdwg.mxu0
    %v201 = vmax.f32 %v199, 0.0
    %s202 = scalar_lea.vmem %s2, 128
    %v203 = vld [vmem:[%s202] sm:$0xff]
    %v204 = vld [vmem:[%s202 + $0x8] sm:$0xff]
    %v205 = vld [vmem:[%s202 + $0x10] sm:$0xff]
    %v206 = vld [vmem:[%s202 + $0x18] sm:$0xff]
    %v207 = vld [vmem:[%s202 + $0x20] sm:$0xff]
    %v208 = vld [vmem:[%s202 + $0x28] sm:$0xff]
    %v209 = vld [vmem:[%s202 + $0x30] sm:$0xff]
    %v210 = vld [vmem:[%s202 + $0x38] sm:$0xff]
    %v211 = vld [vmem:[%s202 + $0x40] sm:$0xff]
    %v212 = vld [vmem:[%s202 + $0x48] sm:$0xff]
    %v213 = vld [vmem:[%s202 + $0x50] sm:$0xff]
    %v214 = vld [vmem:[%s202 + $0x58] sm:$0xff]
    %v215 = vld [vmem:[%s202 + $0x60] sm:$0xff]
    %v216 = vld [vmem:[%s202 + $0x68] sm:$0xff]
    %v217 = vld [vmem:[%s202 + $0x70] sm:$0xff]
    %v218 = vld [vmem:[%s202 + $0x78] sm:$0xff]
    %219 = vmatpush.msra.mxu0 %v218
    %220 = vmatpush.msra.mxu0 %v217
    %221 = vmatpush.msra.mxu0 %v216
    %222 = vmatpush.msra.mxu0 %v215
    %223 = vmatpush.msra.mxu0 %v214
    %224 = vmatpush.msra.mxu0 %v213
    %225 = vmatpush.msra.mxu0 %v212
    %226 = vmatpush.msra.mxu0 %v211
    %227 = vmatpush.msra.mxu0 %v210
    %228 = vmatpush.msra.mxu0 %v209
    %229 = vmatpush.msra.mxu0 %v208
    %230 = vmatpush.msra.mxu0 %v207
    %231 = vmatpush.msra.mxu0 %v206
    %232 = vmatpush.msra.mxu0 %v205
    %233 = vmatpush.msra.mxu0 %v204
    %234 = vmatpush.msra.mxu0 %v203
    %235 = vmatmul.f32.gmra.mxu0 %v201
    %v236 = vpop.f32.mrf.mxu0
    %v237 = vadd.f32 %v172, %v236
    %238 = vdwg.mxu0
    %v239 = vld [vmem:[%s0 + $0x5] sm:$0x1]
    %v240 = vld [vmem:[%s0 + $0x9] sm:$0x1]
    %v241 = vsel %vm18, %v237, 0.0
    %242 = vadd.xlane.f32.xlu0 %v241
    %v243 = vpop.xlane.xlu0 %242
    %v244 = vmul.f32 %v243, %v28
    %v245 = vsub.f32 %v237, %v244
    %v246 = vmul.f32 %v245, %v245
    %v247 = vsel %vm18, %v246, 0.0
    %248 = vadd.xlane.f32.xlu0 %v247
    %v249 = vpop.xlane.xlu0 %248
    %v250 = vmul.f32 %v249, %v28
    %v251 = vadd.f32 %v250, 1e-05
    %v252 = vrsqrt.pop %v251
    %v253 = vmul.f32 %v252, %v251
    %v254 = vmul.f32 %v253, %v252
    %v255 = vmul.f32 0.5, %v254
    %v256 = vsub.f32 1.5, %v255
    %v257 = vmul.f32 %v252, %v256
    %vm258 = vweird.f32 %v251
    %vm259 = vweird.f32 %v252
    %vm260 = vmor %vm258, %vm259
    %v261 = vsel %vm260, %v252, %v257
    %v262 = vmul.f32 %v245, %v261
    %v263 = vmul.f32 %v262, %v239
    %v264 = vadd.f32 %v263, %v240
    %v265 = vadd.f32 %v237, %v264
    %v266 = vld [vmem:[%s0 + $0xd] sm:$0x1]
    %v267 = vld [vmem:[%s0 + $0x11] sm:$0x1]
    %s268 = scalar_lea.vmem %s1, 64
    %v269 = vld [vmem:[%s268] sm:$0xff]
    %v270 = vld [vmem:[%s268 + $0x8] sm:$0xff]
    %v271 = vld [vmem:[%s268 + $0x10] sm:$0xff]
    %v272 = vld [vmem:[%s268 + $0x18] sm:$0xff]
    %v274 = vsel %vm83, %v265, 0
    %276 = vmatpush.msra.mxu0 0.0
    %277 = vmatpush.msra.mxu0 0.0
    %278 = vmatpush.msra.mxu0 0.0
    %279 = vmatpush.msra.mxu0 0.0
    %280 = vmatpush.msra.mxu0 0.0
    %281 = vmatpush.msra.mxu0 0.0
    %282 = vmatpush.msra.mxu0 0.0
    %283 = vmatpush.msra.mxu0 0.0
    %284 = vmatpush.msra.mxu0 0.0
    %285 = vmatpush.msra.mxu0 0.0
    %286 = vmatpush.msra.mxu0 0.0
    %287 = vmatpush.msra.mxu0 0.0
    %288 = vmatpush.msra.mxu0 %v272
    %289 = vmatpush.msra.mxu0 %v271
    %290 = vmatpush.msra.mxu0 %v270
    %291 = vmatpush.msra.mxu0 %v269
    %292 = vmatmul.f32.gmra.mxu0 %v274
    %v293 = vpop.f32.mrf.mxu0
    %v294 = vadd.f32 %v266, %v293
    %295 = vdwg.mxu0
    %v296 = vmax.f32 %v294, 0.0
    %s297 = scalar_lea.vmem %s2, 256
    %v298 = vld [vmem:[%s297] sm:$0xff]
    %v299 = vld [vmem:[%s297 + $0x8] sm:$0xff]
    %v300 = vld [vmem:[%s297 + $0x10] sm:$0xff]
    %v301 = vld [vmem:[%s297 + $0x18] sm:$0xff]
    %v302 = vld [vmem:[%s297 + $0x20] sm:$0xff]
    %v303 = vld [vmem:[%s297 + $0x28] sm:$0xff]
    %v304 = vld [vmem:[%s297 + $0x30] sm:$0xff]
    %v305 = vld [vmem:[%s297 + $0x38] sm:$0xff]
    %v306 = vld [vmem:[%s297 + $0x40] sm:$0xff]
    %v307 = vld [vmem:[%s297 + $0x48] sm:$0xff]
    %v308 = vld [vmem:[%s297 + $0x50] sm:$0xff]
    %v309 = vld [vmem:[%s297 + $0x58] sm:$0xff]
    %v310 = vld [vmem:[%s297 + $0x60] sm:$0xff]
    %v311 = vld [vmem:[%s297 + $0x68] sm:$0xff]
    %v312 = vld [vmem:[%s297 + $0x70] sm:$0xff]
    %v313 = vld [vmem:[%s297 + $0x78] sm:$0xff]
    %314 = vmatpush.msra.mxu0 %v313
    %315 = vmatpush.msra.mxu0 %v312
    %316 = vmatpush.msra.mxu0 %v311
    %317 = vmatpush.msra.mxu0 %v310
    %318 = vmatpush.msra.mxu0 %v309
    %319 = vmatpush.msra.mxu0 %v308
    %320 = vmatpush.msra.mxu0 %v307
    %321 = vmatpush.msra.mxu0 %v306
    %322 = vmatpush.msra.mxu0 %v305
    %323 = vmatpush.msra.mxu0 %v304
    %324 = vmatpush.msra.mxu0 %v303
    %325 = vmatpush.msra.mxu0 %v302
    %326 = vmatpush.msra.mxu0 %v301
    %327 = vmatpush.msra.mxu0 %v300
    %328 = vmatpush.msra.mxu0 %v299
    %329 = vmatpush.msra.mxu0 %v298
    %330 = vmatmul.f32.gmra.mxu0 %v296
    %v331 = vpop.f32.mrf.mxu0
    %v332 = vadd.f32 %v267, %v331
    %333 = vdwg.mxu0
    %v334 = vld [vmem:[%s0 + $0x6] sm:$0x1]
    %v335 = vld [vmem:[%s0 + $0xa] sm:$0x1]
    %v336 = vsel %vm18, %v332, 0.0
    %337 = vadd.xlane.f32.xlu0 %v336
    %v338 = vpop.xlane.xlu0 %337
    %v339 = vmul.f32 %v338, %v28
    %v340 = vsub.f32 %v332, %v339
    %v341 = vmul.f32 %v340, %v340
    %v342 = vsel %vm18, %v341, 0.0
    %343 = vadd.xlane.f32.xlu0 %v342
    %v344 = vpop.xlane.xlu0 %343
    %v345 = vmul.f32 %v344, %v28
    %v346 = vadd.f32 %v345, 1e-05
    %v347 = vrsqrt.pop %v346
    %v348 = vmul.f32 %v347, %v346
    %v349 = vmul.f32 %v348, %v347
    %v350 = vmul.f32 0.5, %v349
    %v351 = vsub.f32 1.5, %v350
    %v352 = vmul.f32 %v347, %v351
    %vm353 = vweird.f32 %v346
    %vm354 = vweird.f32 %v347
    %vm355 = vmor %vm353, %vm354
    %v356 = vsel %vm355, %v347, %v352
    %v357 = vmul.f32 %v340, %v356
    %v358 = vmul.f32 %v357, %v334
    %v359 = vadd.f32 %v358, %v335
    %v360 = vadd.f32 %v332, %v359
    %v361 = vld [vmem:[%s0 + $0xe] sm:$0x1]
    %v362 = vld [vmem:[%s0 + $0x12] sm:$0x1]
    %s363 = scalar_lea.vmem %s1, 96
    %v364 = vld [vmem:[%s363] sm:$0xff]
    %v365 = vld [vmem:[%s363 + $0x8] sm:$0xff]
    %v366 = vld [vmem:[%s363 + $0x10] sm:$0xff]
    %v367 = vld [vmem:[%s363 + $0x18] sm:$0xff]
    %v369 = vsel %vm83, %v360, 0
    %371 = vmatpush.msra.mxu0 0.0
    %372 = vmatpush.msra.mxu0 0.0
    %373 = vmatpush.msra.mxu0 0.0
    %374 = vmatpush.msra.mxu0 0.0
    %375 = vmatpush.msra.mxu0 0.0
    %376 = vmatpush.msra.mxu0 0.0
    %377 = vmatpush.msra.mxu0 0.0
    %378 = vmatpush.msra.mxu0 0.0
    %379 = vmatpush.msra.mxu0 0.0
    %380 = vmatpush.msra.mxu0 0.0
    %381 = vmatpush.msra.mxu0 0.0
    %382 = vmatpush.msra.mxu0 0.0
    %383 = vmatpush.msra.mxu0 %v367
    %384 = vmatpush.msra.mxu0 %v366
    %385 = vmatpush.msra.mxu0 %v365
    %386 = vmatpush.msra.mxu0 %v364
    %387 = vmatmul.f32.gmra.mxu0 %v369
    %v388 = vpop.f32.mrf.mxu0
    %v389 = vadd.f32 %v361, %v388
    %390 = vdwg.mxu0
    %v391 = vmax.f32 %v389, 0.0
    %s392 = scalar_lea.vmem %s2, 384
    %v393 = vld [vmem:[%s392] sm:$0xff]
    %v394 = vld [vmem:[%s392 + $0x8] sm:$0xff]
    %v395 = vld [vmem:[%s392 + $0x10] sm:$0xff]
    %v396 = vld [vmem:[%s392 + $0x18] sm:$0xff]
    %v397 = vld [vmem:[%s392 + $0x20] sm:$0xff]
    %v398 = vld [vmem:[%s392 + $0x28] sm:$0xff]
    %v399 = vld [vmem:[%s392 + $0x30] sm:$0xff]
    %v400 = vld [vmem:[%s392 + $0x38] sm:$0xff]
    %v401 = vld [vmem:[%s392 + $0x40] sm:$0xff]
    %v402 = vld [vmem:[%s392 + $0x48] sm:$0xff]
    %v403 = vld [vmem:[%s392 + $0x50] sm:$0xff]
    %v404 = vld [vmem:[%s392 + $0x58] sm:$0xff]
    %v405 = vld [vmem:[%s392 + $0x60] sm:$0xff]
    %v406 = vld [vmem:[%s392 + $0x68] sm:$0xff]
    %v407 = vld [vmem:[%s392 + $0x70] sm:$0xff]
    %v408 = vld [vmem:[%s392 + $0x78] sm:$0xff]
    %409 = vmatpush.msra.mxu0 %v408
    %410 = vmatpush.msra.mxu0 %v407
    %411 = vmatpush.msra.mxu0 %v406
    %412 = vmatpush.msra.mxu0 %v405
    %413 = vmatpush.msra.mxu0 %v404
    %414 = vmatpush.msra.mxu0 %v403
    %415 = vmatpush.msra.mxu0 %v402
    %416 = vmatpush.msra.mxu0 %v401
    %417 = vmatpush.msra.mxu0 %v400
    %418 = vmatpush.msra.mxu0 %v399
    %419 = vmatpush.msra.mxu0 %v398
    %420 = vmatpush.msra.mxu0 %v397
    %421 = vmatpush.msra.mxu0 %v396
    %422 = vmatpush.msra.mxu0 %v395
    %423 = vmatpush.msra.mxu0 %v394
    %424 = vmatpush.msra.mxu0 %v393
    %425 = vmatmul.f32.gmra.mxu0 %v391
    %v426 = vpop.f32.mrf.mxu0
    %v427 = vadd.f32 %v362, %v426
    %428 = vdwg.mxu0
    %429 = vst.msk [vmem:[#allocation2] sm:$0x1] %vm18, %v427
    // Predicated region
    $region14: #{tpu_custom_call.1} parent=1 // pred_check
      _
    $region15: #{tpu_custom_call.1} parent=1 // pred_check_branch
      %431 = sbr.rel (0) target = $region17
    $region16: #{tpu_custom_call.1} parent=1 // pred_region
      %433 = vsyncadd [#allocation3], 0
      %s435 = sshll.u32 [#allocation2], 4
      %s436 = int_to_ptr.vmem [resolvable:$true] %s435
      %s437 = sshll.u32 %s3, 4
      %s438 = int_to_ptr.hbm [resolvable:$true] %s437
      %440 = dma.vmem_to_hbm [thread:$0]  %s436, 16, %s438, [#allocation3]
    $region17: #{tpu_custom_call.1} parent=1 // pred_fallthru
      _
    // Predicated region
    $region18: #{tpu_custom_call.1} parent=1 // pred_check
      _
    $region19: #{tpu_custom_call.1} parent=1 // pred_check_branch
      %442 = sbr.rel (0) target = $region21
    $region20: #{tpu_custom_call.1} parent=1 // pred_region
      %444 = dma.done [#allocation3], 16
    $region21: #{tpu_custom_call.1} parent=1 // pred_fallthru
      _
    %445 = vsyncpa [#allocation3], 1

</llo_original>
